<compile_context>
chip_gen: v5e
topology: v5e:2x2
jax: 0.10.0
libtpu: 0.0.40
codegen_flags: <defaults>
</compile_context>

<pallas_src>
import functools
import math

import jax
import jax.numpy as jnp
from jax import lax
from jax.experimental import pallas as pl
from jax.experimental.pallas import tpu as pltpu


_LOOP_T_MAX = 256     # T above this -> banded MXU path
_LANE = 128
_TT = 128             # time tile (rows) for the MXU path


def _round_up(x, m):
    return ((x + m - 1) // m) * m


def _vmem_cap_bytes():
    """~0.75 x physical VMEM of the current TPU generation.

    Used both as the explicit scoped-VMEM limit and as the budget that tile
    sizes are derived from (v7x has only 64 MiB physical; v5e's *default*
    scoped limit is ~16 MiB, so we always set the limit explicitly).
    """
    try:
        phys = int(pltpu.get_tpu_info().vmem_capacity_bytes)
    except Exception:
        phys = 64 << 20          # conservative fallback (v7x per-core VMEM)
    return (phys * 3) // 4


# ----------------------------------------------------------------------------
# Path A: serial recursion, gridded over batch groups
# ----------------------------------------------------------------------------
def _td_lambda_loop_kernel(value_ref, reward_ref, weight_ref, out_ref, *,
                           gamma: float, lambda_: float, T: int):
    """One batch-group tile.

    value_ref:  (T+1, Gb, 128), reward_ref: (T, Gb, 128), weight_ref: (Gb, 128)
    out_ref:    (1, 1, 128) f32 per-lane weighted sum of squared TD(l) diffs.
    """
    c2 = gamma * lambda_             # coefficient of ret[t+1]
    c1 = gamma * (1.0 - lambda_)     # coefficient of V[t+1]   (algebraic fold)

    # Seed the carry with V[T]: the lambda term vanishes at t = T-1, so no
    # select is needed anywhere on the serial chain.
    v_next = value_ref[T].astype(jnp.float32)            # (Gb, 128)
    ret_next = v_next
    loss_vec = jnp.zeros(v_next.shape, jnp.float32)

    def step(t, ret_next, v_next, loss_vec):
        r_t = reward_ref[t].astype(jnp.float32)
        v_t = value_ref[t].astype(jnp.float32)
        ret_t = r_t + c1 * v_next + c2 * ret_next
        d = ret_t - v_t
        return ret_t, v_t, loss_vec + d * d

    if T <= 16:
        # Fully static unroll: static row indices, full LLO visibility.
        for t in range(T - 1, -1, -1):
            ret_next, v_next, loss_vec = step(t, ret_next, v_next, loss_vec)
    else:
        # Bounded code size / vreg live ranges for larger T.
        def body(i, carry):
            return step(T - 1 - i, *carry)
        ret_next, v_next, loss_vec = lax.fori_loop(
            0, T, body, (ret_next, v_next, loss_vec), unroll=8)

    # Weight is consumed only here -> load late (short live range).
    w = weight_ref[...].astype(jnp.float32)
    out_ref[...] = jnp.sum(w * loss_vec, axis=0, keepdims=True)[None]


# ----------------------------------------------------------------------------
# Path B: banded discount-matrix MXU path (large T)
# ----------------------------------------------------------------------------
def _td_lambda_band_kernel(weight_ref, delta_ref, disc_ref, out_ref, acc_ref,
                           *, n_band: int):
    """Grid = (batch tile j, time tile ti, band offset d); d is innermost.

    weight_ref: (1, LT) f32
    delta_ref:  (128, LT) bf16 block of delta at time-block (ti + d)
    disc_ref:   (n_band, 128, 128) bf16 banded discount blocks (constant
                index_map -> DMA'd once)
    acc_ref:    (128, LT) f32 scratch accumulating diff for this (j, ti) tile
    out_ref:    (1, 1, 1, LT) f32 per-lane weighted sum of diff^2
    """
    d = pl.program_id(2)

    @pl.when(d == 0)
    def _():
        acc_ref[...] = jnp.zeros_like(acc_ref)

    # diff[t] += (gamma*lambda)^(k-t) * delta[k] for k in band-block d.
    acc_ref[...] += jnp.dot(disc_ref[d], delta_ref[...],
                            preferred_element_type=jnp.float32)

    @pl.when(d == n_band - 1)
    def _():
        diff = acc_ref[...]
        w = weight_ref[...].astype(jnp.float32)                 # (1, LT)
        out_ref[...] = (w * jnp.sum(diff * diff, axis=0,
                                    keepdims=True))[None, None]


# ----------------------------------------------------------------------------
# Wrapper (mirrors TDLambda.forward; returns loss of shape (1,))
# ----------------------------------------------------------------------------
def td_lambda_loss(value, reward, weight=None, gamma: float = 0.9,
                   lambda_: float = 0.8):
    Tp1, B = value.shape
    T = Tp1 - 1
    assert reward.shape == (T, B)
    if weight is None:
        # TDLambda.__init__ registers weight = torch.ones(B)
        weight = jnp.ones((B,), jnp.float32)
    w = jnp.asarray(weight, jnp.float32)

    itemsize = jnp.dtype(value.dtype).itemsize
    cap = _vmem_cap_bytes()

    if T <= _LOOP_T_MAX:
        # ----------------- Path A: gridded serial recursion -----------------
        G = _round_up(B, _LANE) // _LANE                   # 128-lane groups
        sub = {4: 8, 2: 16, 1: 32}.get(itemsize, 8)        # sublane granularity
        if G < 2 * sub:
            g_blk = G                                      # single full-dim tile
        else:
            per_group = 2 * itemsize * (2 * T + 1) * _LANE     # double-buffered
            g_budget = max(sub, ((cap // 3) // per_group) // sub * sub)
            # >=2 tiles (megacore / pipeline), <=32 groups (vreg pressure).
            g_blk = min(32, g_budget, max(sub, (G // 2) // sub * sub))
        G_total = _round_up(G, g_blk)
        n_tiles = G_total // g_blk
        Bpad = G_total * _LANE

        # Padded lanes / groups carry weight 0 -> no loss contribution.
        v3 = jnp.pad(value, ((0, 0), (0, Bpad - B))).reshape(T + 1, G_total, _LANE)
        r3 = jnp.pad(reward, ((0, 0), (0, Bpad - B))).reshape(T, G_total, _LANE)
        w3 = jnp.pad(w, (0, Bpad - B)).reshape(G_total, _LANE)

        kernel = functools.partial(_td_lambda_loop_kernel, gamma=float(gamma),
                                   lambda_=float(lambda_), T=T)
        part = pl.pallas_call(
            kernel,
            out_shape=jax.ShapeDtypeStruct((n_tiles, 1, _LANE), jnp.float32),
            grid=(n_tiles,),
            in_specs=[
                pl.BlockSpec((T + 1, g_blk, _LANE), lambda j: (0, j, 0)),
                pl.BlockSpec((T, g_blk, _LANE), lambda j: (0, j, 0)),
                pl.BlockSpec((g_blk, _LANE), lambda j: (j, 0)),
            ],
            out_specs=pl.BlockSpec((1, 1, _LANE), lambda j: (j, 0, 0)),
            compiler_params=pltpu.CompilerParams(
                dimension_semantics=("parallel",),
                vmem_limit_bytes=cap),
        )(v3, r3, w3)
        loss = (0.5 / float(T * B)) * jnp.sum(part)
        return loss.reshape(1)

    # -------------------- Path B: banded MXU reformulation -------------------
    gl = float(gamma) * float(lambda_)
    Tpad = _round_up(T, _TT)
    n_t_tiles = Tpad // _TT

    # Band width: (gamma*lambda)^k terms below ~1e-8 relative are dropped.
    if gl <= 0.0:
        w_steps = 1
    elif gl >= 1.0:
        w_steps = T
    else:
        w_steps = min(T, int(math.ceil(math.log(1e-8) / math.log(gl))))
    n_band = min(n_t_tiles, -(-(w_steps + _TT - 1) // _TT))
    Tpad_ext = Tpad + (n_band - 1) * _TT      # extra zero rows -> no index clamp

    # Batch lane tile: >=256 for the 256-wide v6e/v7x MXU when the batch allows,
    # but keep >=2 batch tiles whenever Bpad >= 256 (v7x megacore); the time-
    # tile axis is also "parallel", so both cores stay busy for long horizons.
    Bpad = _round_up(B, _LANE)
    LT = _LANE
    for c in (512, 256, _LANE):
        if Bpad >= 2 * c:
            LT = c
            break
    Bpad = _round_up(Bpad, LT)
    n_b_tiles = Bpad // LT

    # delta[t] = r[t] + gamma*V[t+1] - V[t], computed once in XLA (cheap
    # elementwise, avoids overlapping value tiles / sublane-shifted copies in
    # the kernel); padded time rows and lanes are exactly zero, so padded
    # diff rows are zero and padded lanes have weight zero.
    # bf16 storage: MXU-native operand + half the HBM traffic (f32 accumulate
    # keeps the result well inside a 2e-2 tolerance).
    v32 = value.astype(jnp.float32)
    delta = (reward.astype(jnp.float32) + gamma * v32[1:] - v32[:-1]
             ).astype(jnp.bfloat16)
    delta = jnp.pad(delta, ((0, Tpad_ext - T), (0, Bpad - B)))
    w2 = jnp.pad(w, (0, Bpad - B)).reshape(1, Bpad)

    # Banded discount blocks: disc[d][i, j] = (g*l)^(d*128 + j - i), upper tri.
    idx = jnp.arange(_TT)
    pows = (jnp.arange(n_band)[:, None, None] * _TT
            + idx[None, None, :] - idx[None, :, None]).astype(jnp.float32)
    disc = jnp.where(pows >= 0.0, jnp.power(gl, jnp.maximum(pows, 0.0)),
                     0.0).astype(jnp.bfloat16)                # (n_band, 128, 128)

    kernel = functools.partial(_td_lambda_band_kernel, n_band=n_band)
    part = pl.pallas_call(
        kernel,
        out_shape=jax.ShapeDtypeStruct((n_b_tiles, n_t_tiles, 1, LT),
                                       jnp.float32),
        grid=(n_b_tiles, n_t_tiles, n_band),
        in_specs=[
            pl.BlockSpec((1, LT), lambda j, ti, d: (0, j)),             # weight
            pl.BlockSpec((_TT, LT), lambda j, ti, d: (ti + d, j)),      # delta
            pl.BlockSpec((n_band, _TT, _TT), lambda j, ti, d: (0, 0, 0)),  # disc
        ],
        out_specs=pl.BlockSpec((1, 1, 1, LT), lambda j, ti, d: (j, ti, 0, 0)),
        scratch_shapes=[pltpu.VMEM((_TT, LT), jnp.float32)],
        compiler_params=pltpu.CompilerParams(
            dimension_semantics=("parallel", "parallel", "arbitrary"),
            vmem_limit_bytes=cap),
    )(w2, delta, disc)

    loss = (0.5 / float(T * B)) * jnp.sum(part)
    return loss.reshape(1)


# ----------------------------------------------------------------------------
# Plain-JAX reference (same recursion) for correctness checks
# ----------------------------------------------------------------------------
def td_lambda_ref(value, reward, weight, gamma, lambda_):
    T, B = reward.shape
    r = reward[T - 1] + gamma * value[T]
    rets = [r]
    for t in reversed(range(T - 1)):
        r = reward[t] + gamma * value[t + 1] + gamma * lambda_ * (r - value[t + 1])
        rets.append(r)
    ret = jnp.stack(rets[::-1], axis=0)
    return 0.5 * jnp.mean(weight[None, :] * (ret - value[:-1]) ** 2)


# TODO(synk): backward pass (hpc_rll TdLambdaBackward / grad_buf) is not
# implemented; only the forward loss is translated.

if __name__ == "__main__":
    gamma, lambda_ = 0.9, 0.8
    key = jax.random.PRNGKey(0)
    k1, k2, k3, k4, k5, k6 = jax.random.split(key, 6)

    # Small shapes consistent with the module: trajectory T=8, batch B=32.
    T, B = 8, 32
    value = jax.random.normal(k1, (T + 1, B), dtype=jnp.float32)
    reward = jax.random.normal(k2, (T, B), dtype=jnp.float32)
    weight = jnp.ones((B,), jnp.float32)   # module's registered buffer (ones)

    loss = jax.block_until_ready(
        td_lambda_loss(value, reward, weight, gamma=gamma, lambda_=lambda_))
    ref = td_lambda_ref(value, reward, weight, gamma, lambda_)
    assert loss.shape == (1,)
    assert jnp.allclose(loss[0], ref, rtol=1e-5, atol=1e-5), (loss, ref)

    # Path A, fori_loop branch (16 < T <= 256), non-multiple-of-128 batch.
    T1, B1 = 80, 40
    value1 = jax.random.normal(k3, (T1 + 1, B1), dtype=jnp.float32)
    reward1 = jax.random.normal(k4, (T1, B1), dtype=jnp.float32)
    loss1 = jax.block_until_ready(
        td_lambda_loss(value1, reward1, None, gamma=gamma, lambda_=lambda_))
    ref1 = td_lambda_ref(value1, reward1, jnp.ones((B1,), jnp.float32),
                         gamma, lambda_)
    assert loss1.shape == (1,)
    assert jnp.allclose(loss1[0], ref1, rtol=1e-4, atol=1e-4), (loss1, ref1)

    # Path B, banded MXU path (T > 256).
    T2, B2 = 300, 40
    value2 = jax.random.normal(k5, (T2 + 1, B2), dtype=jnp.float32)
    reward2 = jax.random.normal(k6, (T2, B2), dtype=jnp.float32)
    loss2 = jax.block_until_ready(
        td_lambda_loss(value2, reward2, None, gamma=gamma, lambda_=lambda_))
    ref2 = td_lambda_ref(value2, reward2, jnp.ones((B2,), jnp.float32),
                         gamma, lambda_)
    assert loss2.shape == (1,)
    # bf16 MXU operands + banded truncation -> looser tolerance.
    assert jnp.allclose(loss2[0], ref2, rtol=2e-2, atol=2e-2), (loss2, ref2)

    print("KERNEL_OK")
</pallas_src>

<mosaic_0001>
module attributes {stable_mosaic.version = 11 : i64} {
  func.func @_td_lambda_loop_kernel(%arg0: i32, %arg1: memref<9x1x128xf32, #tpu.memory_space<vmem>>, %arg2: memref<8x1x128xf32, #tpu.memory_space<vmem>>, %arg3: memref<1x128xf32, #tpu.memory_space<vmem>>, %arg4: memref<1x1x128xf32, #tpu.memory_space<vmem>>) attributes {dimension_semantics = [#tpu.dimension_semantics<parallel>], iteration_bounds = array<i64: 1>, scalar_prefetch = 0 : i64, scratch_operands = 0 : i64, tpu.core_type = #tpu.core_type<tc>, window_params = [{transform_indices = @transform_0, window_bounds = array<i64: 9, 1, 128>}, {transform_indices = @transform_1, window_bounds = array<i64: 8, 1, 128>}, {transform_indices = @transform_2, window_bounds = array<i64: 1, 128>}, {transform_indices = @transform_3, window_bounds = array<i64: 1, 1, 128>}]} {
    %c8 = arith.constant 8 : index
    %c0 = arith.constant 0 : index
    %c0_0 = arith.constant 0 : index
    %0 = vector.load %arg1[%c8, %c0, %c0_0] : memref<9x1x128xf32, #tpu.memory_space<vmem>>, vector<1x1x128xf32>
    %1 = vector.shape_cast %0 : vector<1x1x128xf32> to vector<1x128xf32>
    %cst = arith.constant 0.000000e+00 : f32
    %2 = vector.broadcast %cst : f32 to vector<1x128xf32>
    %c7 = arith.constant 7 : index
    %c0_1 = arith.constant 0 : index
    %c0_2 = arith.constant 0 : index
    %3 = vector.load %arg2[%c7, %c0_1, %c0_2] : memref<8x1x128xf32, #tpu.memory_space<vmem>>, vector<1x1x128xf32>
    %4 = vector.shape_cast %3 : vector<1x1x128xf32> to vector<1x128xf32>
    %c7_3 = arith.constant 7 : index
    %c0_4 = arith.constant 0 : index
    %c0_5 = arith.constant 0 : index
    %5 = vector.load %arg1[%c7_3, %c0_4, %c0_5] : memref<9x1x128xf32, #tpu.memory_space<vmem>>, vector<1x1x128xf32>
    %6 = vector.shape_cast %5 : vector<1x1x128xf32> to vector<1x128xf32>
    %cst_6 = arith.constant 1.800000e-01 : f32
    %7 = vector.broadcast %cst_6 : f32 to vector<1x128xf32>
    %8 = arith.mulf %7, %1 : vector<1x128xf32>
    %9 = arith.addf %4, %8 : vector<1x128xf32>
    %cst_7 = arith.constant 7.200000e-01 : f32
    %10 = vector.broadcast %cst_7 : f32 to vector<1x128xf32>
    %11 = arith.mulf %10, %1 : vector<1x128xf32>
    %12 = arith.addf %9, %11 : vector<1x128xf32>
    %13 = arith.subf %12, %6 : vector<1x128xf32>
    %14 = arith.mulf %13, %13 : vector<1x128xf32>
    %15 = arith.addf %2, %14 : vector<1x128xf32>
    %c6 = arith.constant 6 : index
    %c0_8 = arith.constant 0 : index
    %c0_9 = arith.constant 0 : index
    %16 = vector.load %arg2[%c6, %c0_8, %c0_9] : memref<8x1x128xf32, #tpu.memory_space<vmem>>, vector<1x1x128xf32>
    %17 = vector.shape_cast %16 : vector<1x1x128xf32> to vector<1x128xf32>
    %c6_10 = arith.constant 6 : index
    %c0_11 = arith.constant 0 : index
    %c0_12 = arith.constant 0 : index
    %18 = vector.load %arg1[%c6_10, %c0_11, %c0_12] : memref<9x1x128xf32, #tpu.memory_space<vmem>>, vector<1x1x128xf32>
    %19 = vector.shape_cast %18 : vector<1x1x128xf32> to vector<1x128xf32>
    %cst_13 = arith.constant 1.800000e-01 : f32
    %20 = vector.broadcast %cst_13 : f32 to vector<1x128xf32>
    %21 = arith.mulf %20, %6 : vector<1x128xf32>
    %22 = arith.addf %17, %21 : vector<1x128xf32>
    %cst_14 = arith.constant 7.200000e-01 : f32
    %23 = vector.broadcast %cst_14 : f32 to vector<1x128xf32>
    %24 = arith.mulf %23, %12 : vector<1x128xf32>
    %25 = arith.addf %22, %24 : vector<1x128xf32>
    %26 = arith.subf %25, %19 : vector<1x128xf32>
    %27 = arith.mulf %26, %26 : vector<1x128xf32>
    %28 = arith.addf %15, %27 : vector<1x128xf32>
    %c5 = arith.constant 5 : index
    %c0_15 = arith.constant 0 : index
    %c0_16 = arith.constant 0 : index
    %29 = vector.load %arg2[%c5, %c0_15, %c0_16] : memref<8x1x128xf32, #tpu.memory_space<vmem>>, vector<1x1x128xf32>
    %30 = vector.shape_cast %29 : vector<1x1x128xf32> to vector<1x128xf32>
    %c5_17 = arith.constant 5 : index
    %c0_18 = arith.constant 0 : index
    %c0_19 = arith.constant 0 : index
    %31 = vector.load %arg1[%c5_17, %c0_18, %c0_19] : memref<9x1x128xf32, #tpu.memory_space<vmem>>, vector<1x1x128xf32>
    %32 = vector.shape_cast %31 : vector<1x1x128xf32> to vector<1x128xf32>
    %cst_20 = arith.constant 1.800000e-01 : f32
    %33 = vector.broadcast %cst_20 : f32 to vector<1x128xf32>
    %34 = arith.mulf %33, %19 : vector<1x128xf32>
    %35 = arith.addf %30, %34 : vector<1x128xf32>
    %cst_21 = arith.constant 7.200000e-01 : f32
    %36 = vector.broadcast %cst_21 : f32 to vector<1x128xf32>
    %37 = arith.mulf %36, %25 : vector<1x128xf32>
    %38 = arith.addf %35, %37 : vector<1x128xf32>
    %39 = arith.subf %38, %32 : vector<1x128xf32>
    %40 = arith.mulf %39, %39 : vector<1x128xf32>
    %41 = arith.addf %28, %40 : vector<1x128xf32>
    %c4 = arith.constant 4 : index
    %c0_22 = arith.constant 0 : index
    %c0_23 = arith.constant 0 : index
    %42 = vector.load %arg2[%c4, %c0_22, %c0_23] : memref<8x1x128xf32, #tpu.memory_space<vmem>>, vector<1x1x128xf32>
    %43 = vector.shape_cast %42 : vector<1x1x128xf32> to vector<1x128xf32>
    %c4_24 = arith.constant 4 : index
    %c0_25 = arith.constant 0 : index
    %c0_26 = arith.constant 0 : index
    %44 = vector.load %arg1[%c4_24, %c0_25, %c0_26] : memref<9x1x128xf32, #tpu.memory_space<vmem>>, vector<1x1x128xf32>
    %45 = vector.shape_cast %44 : vector<1x1x128xf32> to vector<1x128xf32>
    %cst_27 = arith.constant 1.800000e-01 : f32
    %46 = vector.broadcast %cst_27 : f32 to vector<1x128xf32>
    %47 = arith.mulf %46, %32 : vector<1x128xf32>
    %48 = arith.addf %43, %47 : vector<1x128xf32>
    %cst_28 = arith.constant 7.200000e-01 : f32
    %49 = vector.broadcast %cst_28 : f32 to vector<1x128xf32>
    %50 = arith.mulf %49, %38 : vector<1x128xf32>
    %51 = arith.addf %48, %50 : vector<1x128xf32>
    %52 = arith.subf %51, %45 : vector<1x128xf32>
    %53 = arith.mulf %52, %52 : vector<1x128xf32>
    %54 = arith.addf %41, %53 : vector<1x128xf32>
    %c3 = arith.constant 3 : index
    %c0_29 = arith.constant 0 : index
    %c0_30 = arith.constant 0 : index
    %55 = vector.load %arg2[%c3, %c0_29, %c0_30] : memref<8x1x128xf32, #tpu.memory_space<vmem>>, vector<1x1x128xf32>
    %56 = vector.shape_cast %55 : vector<1x1x128xf32> to vector<1x128xf32>
    %c3_31 = arith.constant 3 : index
    %c0_32 = arith.constant 0 : index
    %c0_33 = arith.constant 0 : index
    %57 = vector.load %arg1[%c3_31, %c0_32, %c0_33] : memref<9x1x128xf32, #tpu.memory_space<vmem>>, vector<1x1x128xf32>
    %58 = vector.shape_cast %57 : vector<1x1x128xf32> to vector<1x128xf32>
    %cst_34 = arith.constant 1.800000e-01 : f32
    %59 = vector.broadcast %cst_34 : f32 to vector<1x128xf32>
    %60 = arith.mulf %59, %45 : vector<1x128xf32>
    %61 = arith.addf %56, %60 : vector<1x128xf32>
    %cst_35 = arith.constant 7.200000e-01 : f32
    %62 = vector.broadcast %cst_35 : f32 to vector<1x128xf32>
    %63 = arith.mulf %62, %51 : vector<1x128xf32>
    %64 = arith.addf %61, %63 : vector<1x128xf32>
    %65 = arith.subf %64, %58 : vector<1x128xf32>
    %66 = arith.mulf %65, %65 : vector<1x128xf32>
    %67 = arith.addf %54, %66 : vector<1x128xf32>
    %c2 = arith.constant 2 : index
    %c0_36 = arith.constant 0 : index
    %c0_37 = arith.constant 0 : index
    %68 = vector.load %arg2[%c2, %c0_36, %c0_37] : memref<8x1x128xf32, #tpu.memory_space<vmem>>, vector<1x1x128xf32>
    %69 = vector.shape_cast %68 : vector<1x1x128xf32> to vector<1x128xf32>
    %c2_38 = arith.constant 2 : index
    %c0_39 = arith.constant 0 : index
    %c0_40 = arith.constant 0 : index
    %70 = vector.load %arg1[%c2_38, %c0_39, %c0_40] : memref<9x1x128xf32, #tpu.memory_space<vmem>>, vector<1x1x128xf32>
    %71 = vector.shape_cast %70 : vector<1x1x128xf32> to vector<1x128xf32>
    %cst_41 = arith.constant 1.800000e-01 : f32
    %72 = vector.broadcast %cst_41 : f32 to vector<1x128xf32>
    %73 = arith.mulf %72, %58 : vector<1x128xf32>
    %74 = arith.addf %69, %73 : vector<1x128xf32>
    %cst_42 = arith.constant 7.200000e-01 : f32
    %75 = vector.broadcast %cst_42 : f32 to vector<1x128xf32>
    %76 = arith.mulf %75, %64 : vector<1x128xf32>
    %77 = arith.addf %74, %76 : vector<1x128xf32>
    %78 = arith.subf %77, %71 : vector<1x128xf32>
    %79 = arith.mulf %78, %78 : vector<1x128xf32>
    %80 = arith.addf %67, %79 : vector<1x128xf32>
    %c1 = arith.constant 1 : index
    %c0_43 = arith.constant 0 : index
    %c0_44 = arith.constant 0 : index
    %81 = vector.load %arg2[%c1, %c0_43, %c0_44] : memref<8x1x128xf32, #tpu.memory_space<vmem>>, vector<1x1x128xf32>
    %82 = vector.shape_cast %81 : vector<1x1x128xf32> to vector<1x128xf32>
    %c1_45 = arith.constant 1 : index
    %c0_46 = arith.constant 0 : index
    %c0_47 = arith.constant 0 : index
    %83 = vector.load %arg1[%c1_45, %c0_46, %c0_47] : memref<9x1x128xf32, #tpu.memory_space<vmem>>, vector<1x1x128xf32>
    %84 = vector.shape_cast %83 : vector<1x1x128xf32> to vector<1x128xf32>
    %cst_48 = arith.constant 1.800000e-01 : f32
    %85 = vector.broadcast %cst_48 : f32 to vector<1x128xf32>
    %86 = arith.mulf %85, %71 : vector<1x128xf32>
    %87 = arith.addf %82, %86 : vector<1x128xf32>
    %cst_49 = arith.constant 7.200000e-01 : f32
    %88 = vector.broadcast %cst_49 : f32 to vector<1x128xf32>
    %89 = arith.mulf %88, %77 : vector<1x128xf32>
    %90 = arith.addf %87, %89 : vector<1x128xf32>
    %91 = arith.subf %90, %84 : vector<1x128xf32>
    %92 = arith.mulf %91, %91 : vector<1x128xf32>
    %93 = arith.addf %80, %92 : vector<1x128xf32>
    %c0_50 = arith.constant 0 : index
    %c0_51 = arith.constant 0 : index
    %c0_52 = arith.constant 0 : index
    %94 = vector.load %arg2[%c0_50, %c0_51, %c0_52] : memref<8x1x128xf32, #tpu.memory_space<vmem>>, vector<1x1x128xf32>
    %95 = vector.shape_cast %94 : vector<1x1x128xf32> to vector<1x128xf32>
    %c0_53 = arith.constant 0 : index
    %c0_54 = arith.constant 0 : index
    %c0_55 = arith.constant 0 : index
    %96 = vector.load %arg1[%c0_53, %c0_54, %c0_55] : memref<9x1x128xf32, #tpu.memory_space<vmem>>, vector<1x1x128xf32>
    %97 = vector.shape_cast %96 : vector<1x1x128xf32> to vector<1x128xf32>
    %cst_56 = arith.constant 1.800000e-01 : f32
    %98 = vector.broadcast %cst_56 : f32 to vector<1x128xf32>
    %99 = arith.mulf %98, %84 : vector<1x128xf32>
    %100 = arith.addf %95, %99 : vector<1x128xf32>
    %cst_57 = arith.constant 7.200000e-01 : f32
    %101 = vector.broadcast %cst_57 : f32 to vector<1x128xf32>
    %102 = arith.mulf %101, %90 : vector<1x128xf32>
    %103 = arith.addf %100, %102 : vector<1x128xf32>
    %104 = arith.subf %103, %97 : vector<1x128xf32>
    %105 = arith.mulf %104, %104 : vector<1x128xf32>
    %106 = arith.addf %93, %105 : vector<1x128xf32>
    %c0_58 = arith.constant 0 : index
    %c0_59 = arith.constant 0 : index
    %107 = vector.load %arg3[%c0_58, %c0_59] : memref<1x128xf32, #tpu.memory_space<vmem>>, vector<1x128xf32>
    %108 = arith.mulf %107, %106 : vector<1x128xf32>
    %cst_60 = arith.constant dense<0.000000e+00> : vector<128xf32>
    %109 = vector.multi_reduction <add>, %108, %cst_60 [0] : vector<1x128xf32> to vector<128xf32>
    %110 = vector.shape_cast %109 : vector<128xf32> to vector<1x128xf32>
    %111 = vector.shape_cast %110 : vector<1x128xf32> to vector<1x1x128xf32>
    %c0_61 = arith.constant 0 : index
    %c0_62 = arith.constant 0 : index
    %c0_63 = arith.constant 0 : index
    %112 = vector.load %arg4[%c0_61, %c0_62, %c0_63] : memref<1x1x128xf32, #tpu.memory_space<vmem>>, vector<1x1x128xf32>
    tpu.vector_store %arg4[%c0_61, %c0_62, %c0_63], %111 {strides = array<i32>} : memref<1x1x128xf32, #tpu.memory_space<vmem>>, vector<1x1x128xf32>,
    return
  }
  func.func @transform_0(%arg0: i32) -> (i32, i32, i32) {
    %c0_i32 = arith.constant 0 : i32
    %c0_i32_0 = arith.constant 0 : i32
    %c0_i32_1 = arith.constant 0 : i32
    return %c0_i32, %arg0, %c0_i32_0 : i32, i32, i32
  }
  func.func @transform_1(%arg0: i32) -> (i32, i32, i32) {
    %c0_i32 = arith.constant 0 : i32
    %c0_i32_0 = arith.constant 0 : i32
    %c0_i32_1 = arith.constant 0 : i32
    return %c0_i32, %arg0, %c0_i32_0 : i32, i32, i32
  }
  func.func @transform_2(%arg0: i32) -> (i32, i32) {
    %c0_i32 = arith.constant 0 : i32
    %c0_i32_0 = arith.constant 0 : i32
    return %arg0, %c0_i32 : i32, i32
  }
  func.func @transform_3(%arg0: i32) -> (i32, i32, i32) {
    %c0_i32 = arith.constant 0 : i32
    %c0_i32_0 = arith.constant 0 : i32
    %c0_i32_1 = arith.constant 0 : i32
    return %arg0, %c0_i32, %c0_i32_0 : i32, i32, i32
  }
}

</mosaic_0001>

<llo_original>
// kernel: tpu_custom_call.1
$region0: #{tpu_custom_call.1}
  #allocation0 [shape = 'u32[]', space=smem, size = 0x4, offset = 0x4, fixed_abs, tag = 'smem constant byte address 0x4 - core index']
  #allocation1 [shape = 'u32[72,128]{1,0:T(1,128)}', space=vmem, size = 0x9000, scoped, tag = 'internal scratch']
  %s0 = inlined_call_operand.hbm [shape: f32[9,1,128], index: 0, kind: input, shape index: {}]
  %s1 = inlined_call_operand.hbm [shape: f32[8,1,128], index: 1, kind: input, shape index: {}]
  %s2 = inlined_call_operand.vmem [shape: f32[1,128], index: 2, kind: input, shape index: {}]
  %s3 = inlined_call_operand.hbm [shape: f32[1,1,128], index: 3, kind: output, shape index: {}]
  %s4 = sld [smem:[#allocation0]]
  $region30: #{tpu_custom_call.1} parent=0
    _
  %s6 = ssub.s32 1, %s4
  %s7 = scalar_select 0, %s6, %s4
  $region1: #{tpu_custom_call.1} parent=0
    #allocation2 [shape = 'u8[4608]{0}', space=vmem, size = 0x1400, scoped, tag = 'input window, operand 0, single buffered']
    #allocation3 [shape = 's32[1]{0}', space=sflag, size = 0x4, scoped, tag = 'scoped memory for tpu_custom_call.1']
    #allocation4 [shape = 's32[1]{0}', space=sflag, size = 0x4, scoped, tag = 'scoped memory for tpu_custom_call.1']
    #allocation5 [shape = 'u8[4096]{0}', space=vmem, size = 0x1000, scoped, tag = 'input window, operand 1, single buffered']
    #allocation6 [shape = 's32[1]{0}', space=sflag, size = 0x4, scoped, tag = 'scoped memory for tpu_custom_call.1']
    #allocation7 [shape = 'u8[512]{0}', space=vmem, size = 0x400, scoped, tag = 'output window, operand 0, single buffered']
    %8 = vsyncpa [#allocation3], 0
    %9 = vsyncpa [#allocation6], 0
    %10 = vsyncpa [#allocation4], 0
    // Predicated region
    $region2: #{tpu_custom_call.1} parent=1 // pred_check
      _
    $region3: #{tpu_custom_call.1} parent=1 // pred_check_branch
      %12 = sbr.rel (0) target = $region5
    $region4: #{tpu_custom_call.1} parent=1 // pred_region
      %14 = vsyncadd [#allocation3], 0
      %s15 = sshll.u32 %s0, 4
      %s16 = int_to_ptr.hbm [resolvable:$true] %s15
      %s17 = sshll.u32 [#allocation2], 4
      %s18 = int_to_ptr.vmem [resolvable:$true] %s17
      %23 = dma.hbm_to_vmem [thread:$0]  %s16, 144, %s18, [#allocation3], 16, 16, 1
    $region5: #{tpu_custom_call.1} parent=1 // pred_fallthru
      _
    // Predicated region
    $region6: #{tpu_custom_call.1} parent=1 // pred_check
      _
    $region7: #{tpu_custom_call.1} parent=1 // pred_check_branch
      %25 = sbr.rel (0) target = $region9
    $region8: #{tpu_custom_call.1} parent=1 // pred_region
      %27 = vsyncadd [#allocation6], 0
      %s28 = sshll.u32 %s1, 4
      %s29 = int_to_ptr.hbm [resolvable:$true] %s28
      %s30 = sshll.u32 [#allocation5], 4
      %s31 = int_to_ptr.vmem [resolvable:$true] %s30
      %36 = dma.hbm_to_vmem [thread:$0]  %s29, 128, %s31, [#allocation6], 16, 16, 1
    $region9: #{tpu_custom_call.1} parent=1 // pred_fallthru
      _
    // Predicated region
    $region10: #{tpu_custom_call.1} parent=1 // pred_check
      _
    $region11: #{tpu_custom_call.1} parent=1 // pred_check_branch
      %38 = sbr.rel (0) target = $region13
    $region12: #{tpu_custom_call.1} parent=1 // pred_region
      _
    $region13: #{tpu_custom_call.1} parent=1 // pred_fallthru
      _
    // Predicated region
    $region14: #{tpu_custom_call.1} parent=1 // pred_check
      _
    $region15: #{tpu_custom_call.1} parent=1 // pred_check_branch
      %40 = sbr.rel (0) target = $region17
    $region16: #{tpu_custom_call.1} parent=1 // pred_region
      %42 = dma.done [#allocation3], 144
    $region17: #{tpu_custom_call.1} parent=1 // pred_fallthru
      _
    // Predicated region
    $region18: #{tpu_custom_call.1} parent=1 // pred_check
      _
    $region19: #{tpu_custom_call.1} parent=1 // pred_check_branch
      %44 = sbr.rel (0) target = $region21
    $region20: #{tpu_custom_call.1} parent=1 // pred_region
      %46 = dma.done [#allocation6], 128
    $region21: #{tpu_custom_call.1} parent=1 // pred_fallthru
      _
    %s47 = scalar_lea.vmem [#allocation2], 8
    %v48 = vld [vmem:[%s47] sm:$0x1]
    %s49 = scalar_lea.vmem [#allocation5], 7
    %v50 = vld [vmem:[%s49] sm:$0x1]
    %s51 = scalar_lea.vmem [#allocation2], 7
    %v52 = vld [vmem:[%s51] sm:$0x1]
    %v53 = vmul.f32 %v48, 0.18
    %v54 = vadd.f32 %v50, %v53
    %v55 = vmul.f32 %v48, 0.72
    %v56 = vadd.f32 %v54, %v55
    %v57 = vsub.f32 %v56, %v52
    %v58 = vmul.f32 %v57, %v57
    %v59 = vadd.f32 %v58, 0.0
    %s60 = scalar_lea.vmem [#allocation5], 6
    %v61 = vld [vmem:[%s60] sm:$0x1]
    %s62 = scalar_lea.vmem [#allocation2], 6
    %v63 = vld [vmem:[%s62] sm:$0x1]
    %v64 = vmul.f32 %v52, 0.18
    %v65 = vadd.f32 %v61, %v64
    %v66 = vmul.f32 %v56, 0.72
    %v67 = vadd.f32 %v65, %v66
    %v68 = vsub.f32 %v67, %v63
    %v69 = vmul.f32 %v68, %v68
    %v70 = vadd.f32 %v59, %v69
    %s71 = scalar_lea.vmem [#allocation5], 5
    %v72 = vld [vmem:[%s71] sm:$0x1]
    %s73 = scalar_lea.vmem [#allocation2], 5
    %v74 = vld [vmem:[%s73] sm:$0x1]
    %v75 = vmul.f32 %v63, 0.18
    %v76 = vadd.f32 %v72, %v75
    %v77 = vmul.f32 %v67, 0.72
    %v78 = vadd.f32 %v76, %v77
    %v79 = vsub.f32 %v78, %v74
    %v80 = vmul.f32 %v79, %v79
    %v81 = vadd.f32 %v70, %v80
    %s82 = scalar_lea.vmem [#allocation5], 4
    %v83 = vld [vmem:[%s82] sm:$0x1]
    %s84 = scalar_lea.vmem [#allocation2], 4
    %v85 = vld [vmem:[%s84] sm:$0x1]
    %v86 = vmul.f32 %v74, 0.18
    %v87 = vadd.f32 %v83, %v86
    %v88 = vmul.f32 %v78, 0.72
    %v89 = vadd.f32 %v87, %v88
    %v90 = vsub.f32 %v89, %v85
    %v91 = vmul.f32 %v90, %v90
    %v92 = vadd.f32 %v81, %v91
    %s93 = scalar_lea.vmem [#allocation5], 3
    %v94 = vld [vmem:[%s93] sm:$0x1]
    %s95 = scalar_lea.vmem [#allocation2], 3
    %v96 = vld [vmem:[%s95] sm:$0x1]
    %v97 = vmul.f32 %v85, 0.18
    %v98 = vadd.f32 %v94, %v97
    %v99 = vmul.f32 %v89, 0.72
    %v100 = vadd.f32 %v98, %v99
    %v101 = vsub.f32 %v100, %v96
    %v102 = vmul.f32 %v101, %v101
    %v103 = vadd.f32 %v92, %v102
    %s104 = scalar_lea.vmem [#allocation5], 2
    %v105 = vld [vmem:[%s104] sm:$0x1]
    %s106 = scalar_lea.vmem [#allocation2], 2
    %v107 = vld [vmem:[%s106] sm:$0x1]
    %v108 = vmul.f32 %v96, 0.18
    %v109 = vadd.f32 %v105, %v108
    %v110 = vmul.f32 %v100, 0.72
    %v111 = vadd.f32 %v109, %v110
    %v112 = vsub.f32 %v111, %v107
    %v113 = vmul.f32 %v112, %v112
    %v114 = vadd.f32 %v103, %v113
    %s115 = scalar_lea.vmem [#allocation5], 1
    %v116 = vld [vmem:[%s115] sm:$0x1]
    %s117 = scalar_lea.vmem [#allocation2], 1
    %v118 = vld [vmem:[%s117] sm:$0x1]
    %v119 = vmul.f32 %v107, 0.18
    %v120 = vadd.f32 %v116, %v119
    %v121 = vmul.f32 %v111, 0.72
    %v122 = vadd.f32 %v120, %v121
    %v123 = vsub.f32 %v122, %v118
    %v124 = vmul.f32 %v123, %v123
    %v125 = vadd.f32 %v114, %v124
    %v126 = vld [vmem:[#allocation5] sm:$0x1]
    %v127 = vld [vmem:[#allocation2] sm:$0x1]
    %v128 = vmul.f32 %v118, 0.18
    %v129 = vadd.f32 %v126, %v128
    %v130 = vmul.f32 %v122, 0.72
    %v131 = vadd.f32 %v129, %v130
    %v132 = vsub.f32 %v131, %v127
    %v133 = vmul.f32 %v132, %v132
    %v134 = vadd.f32 %v125, %v133
    %v135 = vld [vmem:[%s2] sm:$0x1]
    %v136 = vmul.f32 %v135, %v134
    %v137 = vadd.f32 %v136, 0.0
    %138 = vst [vmem:[#allocation7] sm:$0x1] %v137
    // Predicated region
    $region22: #{tpu_custom_call.1} parent=1 // pred_check
      _
    $region23: #{tpu_custom_call.1} parent=1 // pred_check_branch
      %140 = sbr.rel (0) target = $region25
    $region24: #{tpu_custom_call.1} parent=1 // pred_region
      %142 = vsyncadd [#allocation4], 0
      %s144 = sshll.u32 [#allocation7], 4
      %s145 = int_to_ptr.vmem [resolvable:$true] %s144
      %s146 = sshll.u32 %s3, 4
      %s147 = int_to_ptr.hbm [resolvable:$true] %s146
      %149 = dma.vmem_to_hbm [thread:$0]  %s145, 16, %s147, [#allocation4]
    $region25: #{tpu_custom_call.1} parent=1 // pred_fallthru
      _
    // Predicated region
    $region26: #{tpu_custom_call.1} parent=1 // pred_check
      _
    $region27: #{tpu_custom_call.1} parent=1 // pred_check_branch
      %151 = sbr.rel (0) target = $region29
    $region28: #{tpu_custom_call.1} parent=1 // pred_region
      %153 = dma.done [#allocation4], 16
    $region29: #{tpu_custom_call.1} parent=1 // pred_fallthru
      _
    %154 = vsyncpa [#allocation3], 1
    %155 = vsyncpa [#allocation6], 1
    %156 = vsyncpa [#allocation4], 1

</llo_original>
